<compile_context>
chip_gen: v7x
topology: tpu7x:2x2x1
jax: 0.10.0
libtpu: 0.0.40
codegen_flags: <defaults>
</compile_context>

<pallas_src>
import functools
import math

import jax
import jax.numpy as jnp
from jax.experimental import pallas as pl
from jax.experimental.pallas import tpu as pltpu


# Cast matmul operands to bf16 (f32 accumulation kept via
# preferred_element_type).  Off by default so the 1e-4 reference tolerance in
# the driver holds; flip on for ~2-4x MXU throughput on v6e/v7x.
USE_BF16_MATMUL = False


def _round_up(x, m):
    return ((x + m - 1) // m) * m


def _vmem_capacity_bytes():
    try:
        info = pltpu.get_tpu_info()
        cap = getattr(info, "vmem_capacity_bytes", None)
        if cap:
            return int(cap)
    except Exception:
        pass
    return 64 * 1024 * 1024  # conservative default: v7x per-TensorCore VMEM


_VMEM_CAP = _vmem_capacity_bytes()
# Budget for the fused-fit decision (leaves headroom for Mosaic scratch and
# regalloc); explicit scoped limit so v5e/v6e's small default doesn't gate us.
_FUSED_VMEM_BUDGET = int(_VMEM_CAP * 0.45)
_VMEM_LIMIT_BYTES = int(_VMEM_CAP * 0.75)


def _maybe_bf16(a):
    return a.astype(jnp.bfloat16) if USE_BF16_MATMUL else a


# ---------------------------------------------------------------------------
# Fused kernel: the whole partitioned pipeline in one pallas_call, tiled
# over the row (micro-batch) dimension.  Weights/biases have constant index
# maps -> DMA'd once and VMEM-resident across all row blocks; intermediate
# activations never touch HBM.
# ---------------------------------------------------------------------------
def _fused_pipeline_kernel(*refs, num_stages, relu_flags):
    x_ref = refs[0]
    o_ref = refs[1 + 2 * num_stages]
    h = x_ref[...].astype(jnp.float32)
    for s in range(num_stages):
        w_ref = refs[1 + 2 * s]
        b_ref = refs[2 + 2 * s]
        h = jnp.dot(
            _maybe_bf16(h), _maybe_bf16(w_ref[...]),
            preferred_element_type=jnp.float32,
        ) + b_ref[...].astype(jnp.float32)
        if relu_flags[s]:
            h = jnp.maximum(h, 0.0)
    o_ref[...] = h.astype(o_ref.dtype)


@functools.lru_cache(maxsize=None)
def _build_fused_pipeline(m_pad, tm, k_in, wb_shapes, relu_flags, dtype_name):
    del dtype_name  # cache key only (params / inputs may change dtype)
    num_stages = len(wb_shapes)
    n_out = wb_shapes[-1][0][1]

    kernel = functools.partial(
        _fused_pipeline_kernel, num_stages=num_stages, relu_flags=relu_flags
    )

    in_specs = [pl.BlockSpec((tm, k_in), lambda i: (i, 0))]
    for (w_shape, b_shape) in wb_shapes:
        # Constant index maps: stage params fetched exactly once, resident.
        in_specs.append(pl.BlockSpec(w_shape, lambda i: (0, 0)))
        in_specs.append(pl.BlockSpec(b_shape, lambda i: (0, 0)))

    flops = sum(2 * m_pad * wk * wn for (wk, wn), _ in wb_shapes)
    bytes_accessed = 4 * (
        m_pad * k_in
        + sum(wk * wn + wn for (wk, wn), _ in wb_shapes)
        + m_pad * n_out
    )

    return pl.pallas_call(
        kernel,
        out_shape=jax.ShapeDtypeStruct((m_pad, n_out), jnp.float32),
        grid_spec=pltpu.PrefetchScalarGridSpec(
            num_scalar_prefetch=0,
            grid=(m_pad // tm,),
            in_specs=in_specs,
            out_specs=pl.BlockSpec((tm, n_out), lambda i: (i, 0)),
        ),
        compiler_params=pltpu.CompilerParams(
            dimension_semantics=("parallel",),  # shards row blocks on v7x's 2 TCs
            vmem_limit_bytes=_VMEM_LIMIT_BYTES,
        ),
        cost_estimate=pl.CostEstimate(
            flops=flops, transcendentals=0, bytes_accessed=bytes_accessed
        ),
    )


def fused_pipeline(x, wb, relu_flags, tm):
    M, K = x.shape
    m_pad = _round_up(M, tm)
    if m_pad != M:
        x = jnp.pad(x, ((0, m_pad - M), (0, 0)))
    wb_shapes = tuple((tuple(w.shape), tuple(b.shape)) for w, b in wb)
    f = _build_fused_pipeline(
        m_pad, tm, K, wb_shapes, tuple(relu_flags), str(jnp.dtype(x.dtype))
    )
    flat = [x]
    for w, b in wb:
        flat.extend([w, b])
    out = f(*flat)
    if m_pad != M:
        out = out[:M]
    return out


def _fused_vmem_estimate(tm, k_in, wb_shapes, itemsize):
    """Conservative VMEM estimate incl. Pallas' 2x buffering of blocks."""
    total = 2 * tm * k_in * itemsize            # x block (double-buffered)
    n_out = wb_shapes[-1][0][1]
    for (wk, wn), (_, bn) in wb_shapes:
        total += 2 * wk * wn * itemsize + 2 * bn * itemsize  # resident params
        total += tm * wn * 4                                 # f32 intermediate
    total += 2 * tm * n_out * 4                 # output block (double-buffered)
    return total


def _plan_fused_row_tile(M, K, wb_shapes, itemsize):
    """Pick the largest fused row-block that fits the VMEM budget, or None."""
    cands = []
    if M <= 512:
        cands.append(M)  # full-extent row block (always layout-legal)
    cands += [t for t in (512, 256, 128, 64, 32, 16, 8) if t < M]
    for tm in cands:
        if _fused_vmem_estimate(tm, K, wb_shapes, itemsize) <= _FUSED_VMEM_BUDGET:
            return tm
    return None


# ---------------------------------------------------------------------------
# Tiled kernel: one partition  out = act(x @ w + b)   (general fallback).
# Accumulates into the resident f32 output block; bias+ReLU fused into the
# final-k write (single load + single store of the tile on the last step).
# ---------------------------------------------------------------------------
def _stage_kernel(x_ref, w_ref, b_ref, o_ref, *, apply_relu, nk):
    partial = jnp.dot(
        _maybe_bf16(x_ref[...]), _maybe_bf16(w_ref[...]),
        preferred_element_type=jnp.float32,
    )

    def _epilogue(acc):
        y = acc + b_ref[...].astype(jnp.float32)
        if apply_relu:
            y = jnp.maximum(y, 0.0)
        return y

    if nk == 1:
        # Single reduction step: exactly one store, no accumulator round-trip.
        o_ref[...] = _epilogue(partial)
    else:
        k = pl.program_id(2)

        @pl.when(k == 0)
        def _():
            o_ref[...] = partial

        @pl.when((k > 0) & (k < nk - 1))
        def _():
            o_ref[...] = o_ref[...] + partial

        @pl.when(k == nk - 1)
        def _():
            # Fused final-k epilogue: bias + ReLU in the same tile write.
            o_ref[...] = _epilogue(o_ref[...] + partial)


def _pick_tile(dim, prefs, align):
    """MXU-sized tile; ragged dims get padded rather than full-extent blocks."""
    for p in prefs:
        if dim % p == 0:
            return p
    if dim <= prefs[-1]:
        return _round_up(dim, align)  # small dim: single aligned block
    return prefs[-1]                  # ragged large dim: smallest MXU pref; pad


def linear_stage(x, w, b, *, apply_relu):
    """Run one partition (Linear [+ReLU]) of the pipe graph on a micro-batch."""
    M, K = x.shape
    K2, N = w.shape
    assert K == K2 and b.shape == (1, N)

    tm = _pick_tile(M, (512, 256, 128), align=8)
    tn = _pick_tile(N, (512, 256, 128), align=128)
    tk = _pick_tile(K, (512, 256, 128), align=128)

    m_pad, k_pad, n_pad = _round_up(M, tm), _round_up(K, tk), _round_up(N, tn)
    # Zero-padding is exact for the K reduction; padded M/N rows/cols are
    # sliced off below.  Only triggered for ragged shapes.
    if (m_pad, k_pad) != (M, K):
        x = jnp.pad(x, ((0, m_pad - M), (0, k_pad - K)))
    if (k_pad, n_pad) != (K, N):
        w = jnp.pad(w, ((0, k_pad - K), (0, n_pad - N)))
    if n_pad != N:
        b = jnp.pad(b, ((0, 0), (0, n_pad - N)))

    nk = k_pad // tk
    kernel = functools.partial(_stage_kernel, apply_relu=apply_relu, nk=nk)

    out = pl.pallas_call(
        kernel,
        out_shape=jax.ShapeDtypeStruct((m_pad, n_pad), jnp.float32),
        grid_spec=pltpu.PrefetchScalarGridSpec(
            num_scalar_prefetch=0,
            grid=(m_pad // tm, n_pad // tn, nk),
            in_specs=[
                pl.BlockSpec((tm, tk), lambda i, j, k: (i, k)),
                pl.BlockSpec((tk, tn), lambda i, j, k: (k, j)),
                pl.BlockSpec((1, tn), lambda i, j, k: (0, j)),
            ],
            out_specs=pl.BlockSpec((tm, tn), lambda i, j, k: (i, j)),
        ),
        compiler_params=pltpu.CompilerParams(
            dimension_semantics=("parallel", "parallel", "arbitrary"),
            vmem_limit_bytes=_VMEM_LIMIT_BYTES,
        ),
        cost_estimate=pl.CostEstimate(
            flops=2 * m_pad * k_pad * n_pad,
            transcendentals=0,
            bytes_accessed=4 * (m_pad * k_pad + k_pad * n_pad + n_pad + m_pad * n_pad),
        ),
    )(x, w, b)
    if (m_pad, n_pad) != (M, N):
        out = out[:M, :N]
    return out


# ---------------------------------------------------------------------------
# Pipeline dispatch: single fused launch when the stage params fit VMEM,
# else per-stage MXU-tiled fallback (intermediates round-trip HBM).
# ---------------------------------------------------------------------------
@functools.partial(jax.jit, static_argnums=(2,))
def _apply_pipeline(x, wb, relu_flags):
    wb_shapes = tuple((tuple(w.shape), tuple(b.shape)) for w, b in wb)
    itemsize = jnp.dtype(x.dtype).itemsize
    tm = _plan_fused_row_tile(x.shape[0], x.shape[1], wb_shapes, itemsize)
    if tm is not None:
        return fused_pipeline(x, wb, relu_flags, tm)
    for (w, b), relu in zip(wb, relu_flags):
        x = linear_stage(x, w, b, apply_relu=relu)
    return x


# ---------------------------------------------------------------------------
# Runner: JAX analogue of PipeGraphRunnerWithSE.forward
# ---------------------------------------------------------------------------
class PipeGraphRunnerWithSE:
    def __init__(self, stage_params, batch_cnt=2):
        # stage_params: list of (W [K,N], b [1,N], apply_relu) — one per
        # partition/worker of the partitioned graph.
        self.wb = tuple((w, b) for w, b, _ in stage_params)
        self.relu_flags = tuple(bool(r) for _, _, r in stage_params)
        self.batch_cnt = batch_cnt
        self.batch_no = 0
        self.initialized = False
        # TODO(synk): host-side Queue/thread_pool_queue plumbing, mp.spawn'd
        # gradient reducers and CUDA event.synchronize() have no device compute
        # and are not modeled.
        # Perf note: _apply_pipeline accepts any M, so callers that have all
        # batch_cnt micro-batches available can concatenate them into a single
        # forward() to amortize launch + weight-DMA overhead (the M=16 case is
        # launch/DMA-latency bound).

    def _run_partition_graph(self, x):
        return _apply_pipeline(x, self.wb, self.relu_flags)

    def reset(self):
        self.batch_no = 0

    def forward(self, *args):
        if not self.initialized:
            # First call: gen_partition_graph() traces/partitions the module
            # and returns the graph output for the example inputs.
            self.initialized = True
            out = self._run_partition_graph(args[0])
            return [jax.lax.stop_gradient(out)]

        batch_no = self.batch_no
        self.batch_no += 1
        del batch_no  # only used for queue bookkeeping in the original

        out = self._run_partition_graph(args[0])
        # output_val.detach() in the original; requires_grad_() has no JAX
        # equivalent at this level.
        out = jax.lax.stop_gradient(out)
        return [out]

    __call__ = forward


# ---------------------------------------------------------------------------
# Driver
# ---------------------------------------------------------------------------
if __name__ == "__main__":
    key = jax.random.PRNGKey(0)
    k_x, k_w0, k_b0, k_w1, k_b1, k_x2, k_w2, k_b2, k_x3, k_w3, k_b3 = (
        jax.random.split(key, 11)
    )

    M, D_IN, HID, D_OUT = 16, 128, 128, 128

    x = jax.random.normal(k_x, (M, D_IN), dtype=jnp.float32)

    # Deterministic parameter init (synthetic partitioned 2-stage MLP).
    w0 = jax.random.normal(k_w0, (D_IN, HID), dtype=jnp.float32) * 0.05
    b0 = jax.random.normal(k_b0, (1, HID), dtype=jnp.float32) * 0.05
    w1 = jax.random.normal(k_w1, (HID, D_OUT), dtype=jnp.float32) * 0.05
    b1 = jax.random.normal(k_b1, (1, D_OUT), dtype=jnp.float32) * 0.05

    runner = PipeGraphRunnerWithSE(
        stage_params=[(w0, b0, True), (w1, b1, False)], batch_cnt=2
    )

    # First call == gen_partition_graph path; second call == pipelined path.
    out_init = runner(x)
    outs = runner(x)
    out = jax.block_until_ready(outs[0])

    # Reference check against plain JAX.
    ref = jnp.maximum(x @ w0 + b0, 0.0) @ w1 + b1
    assert out.shape == (M, D_OUT)
    assert jnp.allclose(out, ref, atol=1e-4, rtol=1e-4)
    assert jnp.allclose(
        jax.block_until_ready(out_init[0]), ref, atol=1e-4, rtol=1e-4
    )

    # Exercise the tiled (per-stage) fallback path on the same shapes.
    h_tiled = linear_stage(x, w0, b0, apply_relu=True)
    out_tiled = jax.block_until_ready(
        linear_stage(h_tiled, w1, b1, apply_relu=False)
    )
    assert jnp.allclose(out_tiled, ref, atol=1e-4, rtol=1e-4)

    # Exercise the ragged-edge (padding) path of the tiled fallback.
    x2 = jax.random.normal(k_x2, (20, 96), dtype=jnp.float32)
    w2 = jax.random.normal(k_w2, (96, 130), dtype=jnp.float32) * 0.05
    b2 = jax.random.normal(k_b2, (1, 130), dtype=jnp.float32) * 0.05
    out_rag = jax.block_until_ready(linear_stage(x2, w2, b2, apply_relu=True))
    ref_rag = jnp.maximum(x2 @ w2 + b2, 0.0)
    assert jnp.allclose(out_rag, ref_rag, atol=1e-4, rtol=1e-4)

    # Exercise the multi-step K accumulation path (nk > 1) of the tiled kernel.
    x3 = jax.random.normal(k_x3, (16, 768), dtype=jnp.float32)
    w3 = jax.random.normal(k_w3, (768, 128), dtype=jnp.float32) * 0.05
    b3 = jax.random.normal(k_b3, (1, 128), dtype=jnp.float32) * 0.05
    out_acc = jax.block_until_ready(linear_stage(x3, w3, b3, apply_relu=False))
    ref_acc = x3 @ w3 + b3
    assert jnp.allclose(out_acc, ref_acc, atol=1e-3, rtol=1e-4)

    print("KERNEL_OK")
</pallas_src>

<mosaic_0001>
module attributes {stable_mosaic.version = 11 : i64} {
  func.func @_fused_pipeline_kernel(%arg0: i32, %arg1: memref<16x128xf32, #tpu.memory_space<vmem>>, %arg2: memref<128x128xf32, #tpu.memory_space<vmem>>, %arg3: memref<1x128xf32, #tpu.memory_space<vmem>>, %arg4: memref<128x128xf32, #tpu.memory_space<vmem>>, %arg5: memref<1x128xf32, #tpu.memory_space<vmem>>, %arg6: memref<16x128xf32, #tpu.memory_space<vmem>>) attributes {dimension_semantics = [#tpu.dimension_semantics<parallel>], iteration_bounds = array<i64: 1>, scalar_prefetch = 0 : i64, scratch_operands = 0 : i64, tpu.core_type = #tpu.core_type<tc>, window_params = [{transform_indices = @transform_0, window_bounds = array<i64: 16, 128>}, {pipeline_mode = #tpu.pipeline_mode<synchronous>, transform_indices = @transform_1, window_bounds = array<i64: 128, 128>}, {pipeline_mode = #tpu.pipeline_mode<synchronous>, transform_indices = @transform_2, window_bounds = array<i64: 1, 128>}, {pipeline_mode = #tpu.pipeline_mode<synchronous>, transform_indices = @transform_3, window_bounds = array<i64: 128, 128>}, {pipeline_mode = #tpu.pipeline_mode<synchronous>, transform_indices = @transform_4, window_bounds = array<i64: 1, 128>}, {transform_indices = @transform_5, window_bounds = array<i64: 16, 128>}]} {
    %c0 = arith.constant 0 : index
    %c0_0 = arith.constant 0 : index
    %0 = vector.load %arg1[%c0, %c0_0] : memref<16x128xf32, #tpu.memory_space<vmem>>, vector<16x128xf32>
    %c0_1 = arith.constant 0 : index
    %c0_2 = arith.constant 0 : index
    %1 = vector.load %arg2[%c0_1, %c0_2] : memref<128x128xf32, #tpu.memory_space<vmem>>, vector<128x128xf32>
    %cst = arith.constant dense<0.000000e+00> : vector<16x128xf32>
    %2 = tpu.matmul %0, %1, %cst {dimension_numbers = #tpu.dot_dimension_numbers<[1], [0], [0], [1], [0, 0, 1, 1], [], []>} : vector<16x128xf32>, vector<128x128xf32>, vector<16x128xf32> -> vector<16x128xf32>
    %c0_3 = arith.constant 0 : index
    %c0_4 = arith.constant 0 : index
    %3 = vector.load %arg3[%c0_3, %c0_4] : memref<1x128xf32, #tpu.memory_space<vmem>>, vector<1x128xf32>
    %4 = vector.broadcast %3 : vector<1x128xf32> to vector<16x128xf32>
    %5 = arith.addf %2, %4 : vector<16x128xf32>
    %cst_5 = arith.constant 0.000000e+00 : f32
    %6 = vector.broadcast %cst_5 : f32 to vector<16x128xf32>
    %7 = arith.maximumf %5, %6 : vector<16x128xf32>
    %c0_6 = arith.constant 0 : index
    %c0_7 = arith.constant 0 : index
    %8 = vector.load %arg4[%c0_6, %c0_7] : memref<128x128xf32, #tpu.memory_space<vmem>>, vector<128x128xf32>
    %cst_8 = arith.constant dense<0.000000e+00> : vector<16x128xf32>
    %9 = tpu.matmul %7, %8, %cst_8 {dimension_numbers = #tpu.dot_dimension_numbers<[1], [0], [0], [1], [0, 0, 1, 1], [], []>} : vector<16x128xf32>, vector<128x128xf32>, vector<16x128xf32> -> vector<16x128xf32>
    %c0_9 = arith.constant 0 : index
    %c0_10 = arith.constant 0 : index
    %10 = vector.load %arg5[%c0_9, %c0_10] : memref<1x128xf32, #tpu.memory_space<vmem>>, vector<1x128xf32>
    %11 = vector.broadcast %10 : vector<1x128xf32> to vector<16x128xf32>
    %12 = arith.addf %9, %11 : vector<16x128xf32>
    %c0_11 = arith.constant 0 : index
    %c0_12 = arith.constant 0 : index
    %13 = vector.load %arg6[%c0_11, %c0_12] : memref<16x128xf32, #tpu.memory_space<vmem>>, vector<16x128xf32>
    tpu.vector_store %arg6[%c0_11, %c0_12], %12 {strides = array<i32>} : memref<16x128xf32, #tpu.memory_space<vmem>>, vector<16x128xf32>,
    return
  }
  func.func @transform_0(%arg0: i32) -> (i32, i32) {
    %c0_i32 = arith.constant 0 : i32
    %c0_i32_0 = arith.constant 0 : i32
    return %arg0, %c0_i32 : i32, i32
  }
  func.func @transform_1(%arg0: i32) -> (i32, i32) {
    %c0_i32 = arith.constant 0 : i32
    %c0_i32_0 = arith.constant 0 : i32
    %c0_i32_1 = arith.constant 0 : i32
    return %c0_i32, %c0_i32_0 : i32, i32
  }
  func.func @transform_2(%arg0: i32) -> (i32, i32) {
    %c0_i32 = arith.constant 0 : i32
    %c0_i32_0 = arith.constant 0 : i32
    %c0_i32_1 = arith.constant 0 : i32
    return %c0_i32, %c0_i32_0 : i32, i32
  }
  func.func @transform_3(%arg0: i32) -> (i32, i32) {
    %c0_i32 = arith.constant 0 : i32
    %c0_i32_0 = arith.constant 0 : i32
    %c0_i32_1 = arith.constant 0 : i32
    return %c0_i32, %c0_i32_0 : i32, i32
  }
  func.func @transform_4(%arg0: i32) -> (i32, i32) {
    %c0_i32 = arith.constant 0 : i32
    %c0_i32_0 = arith.constant 0 : i32
    %c0_i32_1 = arith.constant 0 : i32
    return %c0_i32, %c0_i32_0 : i32, i32
  }
  func.func @transform_5(%arg0: i32) -> (i32, i32) {
    %c0_i32 = arith.constant 0 : i32
    %c0_i32_0 = arith.constant 0 : i32
    return %arg0, %c0_i32 : i32, i32
  }
}

</mosaic_0001>

<llo_original>
// kernel: _apply_pipeline.1
$region0: #{_apply_pipeline.1}
  #allocation0 [shape = 'u32[]', space=smem, size = 0x4, offset = 0x4, fixed_abs, tag = 'smem constant byte address 0x4 - core index']
  #allocation1 [shape = 'u32[144,128]{1,0:T(1,128)}', space=vmem, size = 0x12000, scoped, tag = 'internal scratch']
  %s0 = inlined_call_operand.hbm [shape: f32[16,128], index: 0, kind: input, shape index: {}]
  %s1 = inlined_call_operand.hbm [shape: f32[128,128], index: 1, kind: input, shape index: {}]
  %s2 = inlined_call_operand.vmem [shape: f32[1,128], index: 2, kind: input, shape index: {}]
  %s3 = inlined_call_operand.hbm [shape: f32[128,128], index: 3, kind: input, shape index: {}]
  %s4 = inlined_call_operand.vmem [shape: f32[1,128], index: 4, kind: input, shape index: {}]
  %s5 = inlined_call_operand.hbm [shape: f32[16,128], index: 5, kind: output, shape index: {}]
  %s6 = sld [smem:[#allocation0]]
  $region42: #{_apply_pipeline.1} parent=0
    _
  %s8 = ssub.s32 1, %s6
  %s9 = scalar_select 0, %s8, %s6
  $region1: #{_apply_pipeline.1} parent=0
    #allocation2 [shape = 'u8[8192]{0}', space=vmem, size = 0x2000, scoped, tag = 'input window, operand 0, single buffered']
    #allocation3 [shape = 's32[1]{0}', space=sflag, size = 0x4, scoped, tag = 'scoped memory for _apply_pipeline.1']
    #allocation4 [shape = 's32[1]{0}', space=sflag, size = 0x4, scoped, tag = 'scoped memory for _apply_pipeline.1']
    #allocation5 [shape = 'u8[65536]{0}', space=vmem, size = 0x10000, scoped, tag = 'input window, operand 1, single buffered']
    #allocation6 [shape = 's32[1]{0}', space=sflag, size = 0x4, scoped, tag = 'scoped memory for _apply_pipeline.1']
    #allocation7 [shape = 'u8[65536]{0}', space=vmem, size = 0x10000, scoped, tag = 'input window, operand 3, single buffered']
    #allocation8 [shape = 'u8[8192]{0}', space=vmem, size = 0x2000, scoped, tag = 'output window, operand 0, single buffered']
    %10 = vsyncpa [#allocation3], 0
    %11 = vsyncpa [#allocation6], 0
    %12 = vsyncpa [#allocation4], 0
    // Predicated region
    $region2: #{_apply_pipeline.1} parent=1 // pred_check
      _
    $region3: #{_apply_pipeline.1} parent=1 // pred_check_branch
      %14 = sbr.rel (0) target = $region5
    $region4: #{_apply_pipeline.1} parent=1 // pred_region
      %s16 = ssub.s32 256, 256
      %17 = vsyncadd [#allocation3], %s16
      %s18 = sshll.u32 [#allocation2], 4
      %s19 = int_to_ptr.vmem [resolvable:$true] %s18
      %24 = dma.hbm_to_vmem [thread:$0]  %s0, 256, %s19, [#allocation3], 128, 128, 8
    $region5: #{_apply_pipeline.1} parent=1 // pred_fallthru
      _
    // Predicated region
    $region6: #{_apply_pipeline.1} parent=1 // pred_check
      _
    $region7: #{_apply_pipeline.1} parent=1 // pred_check_branch
      %26 = sbr.rel (0) target = $region9
    $region8: #{_apply_pipeline.1} parent=1 // pred_region
      %s28 = ssub.s32 2048, 2048
      %29 = vsyncadd [#allocation6], %s28
      %s30 = sshll.u32 [#allocation5], 4
      %s31 = int_to_ptr.vmem [resolvable:$true] %s30
      %36 = dma.hbm_to_vmem [thread:$0]  %s1, 2048, %s31, [#allocation6], 128, 128, 8
    $region9: #{_apply_pipeline.1} parent=1 // pred_fallthru
      _
    // Predicated region
    $region10: #{_apply_pipeline.1} parent=1 // pred_check
      _
    $region11: #{_apply_pipeline.1} parent=1 // pred_check_branch
      %38 = sbr.rel (0) target = $region13
    $region12: #{_apply_pipeline.1} parent=1 // pred_region
      _
    $region13: #{_apply_pipeline.1} parent=1 // pred_fallthru
      _
    // Predicated region
    $region14: #{_apply_pipeline.1} parent=1 // pred_check
      _
    $region15: #{_apply_pipeline.1} parent=1 // pred_check_branch
      %40 = sbr.rel (0) target = $region17
    $region16: #{_apply_pipeline.1} parent=1 // pred_region
      %s42 = ssub.s32 2048, 2048
      %43 = vsyncadd [#allocation6], %s42
      %s44 = sshll.u32 [#allocation7], 4
      %s45 = int_to_ptr.vmem [resolvable:$true] %s44
      %50 = dma.hbm_to_vmem [thread:$0]  %s3, 2048, %s45, [#allocation6], 128, 128, 8
    $region17: #{_apply_pipeline.1} parent=1 // pred_fallthru
      _
    // Predicated region
    $region18: #{_apply_pipeline.1} parent=1 // pred_check
      _
    $region19: #{_apply_pipeline.1} parent=1 // pred_check_branch
      %52 = sbr.rel (0) target = $region21
    $region20: #{_apply_pipeline.1} parent=1 // pred_region
      _
    $region21: #{_apply_pipeline.1} parent=1 // pred_fallthru
      _
    // Predicated region
    $region22: #{_apply_pipeline.1} parent=1 // pred_check
      _
    $region23: #{_apply_pipeline.1} parent=1 // pred_check_branch
      %54 = sbr.rel (0) target = $region25
    $region24: #{_apply_pipeline.1} parent=1 // pred_region
      %55 = dma.done [#allocation3], 256
    $region25: #{_apply_pipeline.1} parent=1 // pred_fallthru
      _
    // Predicated region
    $region26: #{_apply_pipeline.1} parent=1 // pred_check
      _
    $region27: #{_apply_pipeline.1} parent=1 // pred_check_branch
      %57 = sbr.rel (0) target = $region29
    $region28: #{_apply_pipeline.1} parent=1 // pred_region
      %58 = dma.done [#allocation6], 2048
    $region29: #{_apply_pipeline.1} parent=1 // pred_fallthru
      _
    // Predicated region
    $region30: #{_apply_pipeline.1} parent=1 // pred_check
      _
    $region31: #{_apply_pipeline.1} parent=1 // pred_check_branch
      %60 = sbr.rel (0) target = $region33
    $region32: #{_apply_pipeline.1} parent=1 // pred_region
      %61 = dma.done [#allocation6], 2048
    $region33: #{_apply_pipeline.1} parent=1 // pred_fallthru
      _
    %v62 = vld [vmem:[#allocation2] sm:$0xff]
    %v63 = vld [vmem:[#allocation2 + $0x8] sm:$0xff]
    %v64 = vld [vmem:[#allocation5] sm:$0xff]
    %v65 = vld [vmem:[#allocation5 + $0x8] sm:$0xff]
    %v66 = vld [vmem:[#allocation5 + $0x10] sm:$0xff]
    %v67 = vld [vmem:[#allocation5 + $0x18] sm:$0xff]
    %v68 = vld [vmem:[#allocation5 + $0x20] sm:$0xff]
    %v69 = vld [vmem:[#allocation5 + $0x28] sm:$0xff]
    %v70 = vld [vmem:[#allocation5 + $0x30] sm:$0xff]
    %v71 = vld [vmem:[#allocation5 + $0x38] sm:$0xff]
    %v72 = vld [vmem:[#allocation5 + $0x40] sm:$0xff]
    %v73 = vld [vmem:[#allocation5 + $0x48] sm:$0xff]
    %v74 = vld [vmem:[#allocation5 + $0x50] sm:$0xff]
    %v75 = vld [vmem:[#allocation5 + $0x58] sm:$0xff]
    %v76 = vld [vmem:[#allocation5 + $0x60] sm:$0xff]
    %v77 = vld [vmem:[#allocation5 + $0x68] sm:$0xff]
    %v78 = vld [vmem:[#allocation5 + $0x70] sm:$0xff]
    %v79 = vld [vmem:[#allocation5 + $0x78] sm:$0xff]
    %v80 = vld [vmem:[%s2] sm:$0x1]
    %v82 = vlaneseq
    %v83 = vshrl.u32 %v82, 7
    %v84 = vsub.s32 0, %v83
    %v85 = vrot.slane %v80, %v84
    %87 = vmatprep.subr.mxu0 0.0
    %88 = vmatpush1.msra.mxu0 %v64
    %89 = vmatprep.subr.mxu0 0.0
    %90 = vmatpush1.msra.mxu0 %v65
    %91 = vmatprep.subr.mxu0 0.0
    %92 = vmatpush1.msra.mxu0 %v66
    %93 = vmatprep.subr.mxu0 0.0
    %94 = vmatpush1.msra.mxu0 %v67
    %95 = vmatprep.subr.mxu0 0.0
    %96 = vmatpush1.msra.mxu0 %v68
    %97 = vmatprep.subr.mxu0 0.0
    %98 = vmatpush1.msra.mxu0 %v69
    %99 = vmatprep.subr.mxu0 0.0
    %100 = vmatpush1.msra.mxu0 %v70
    %101 = vmatprep.subr.mxu0 0.0
    %102 = vmatpush1.msra.mxu0 %v71
    %103 = vmatprep.subr.mxu0 0.0
    %104 = vmatpush1.msra.mxu0 %v72
    %105 = vmatprep.subr.mxu0 0.0
    %106 = vmatpush1.msra.mxu0 %v73
    %107 = vmatprep.subr.mxu0 0.0
    %108 = vmatpush1.msra.mxu0 %v74
    %109 = vmatprep.subr.mxu0 0.0
    %110 = vmatpush1.msra.mxu0 %v75
    %111 = vmatprep.subr.mxu0 0.0
    %112 = vmatpush1.msra.mxu0 %v76
    %113 = vmatprep.subr.mxu0 0.0
    %114 = vmatpush1.msra.mxu0 %v77
    %115 = vmatprep.subr.mxu0 0.0
    %116 = vmatpush1.msra.mxu0 %v78
    %117 = vmatprep.subr.mxu0 0.0
    %118 = vmatpush1.msra.mxu0 %v79
    %119 = vmatprep.subr.mxu0 0.0
    %120 = vmatpush1.msra.mxu0 0.0
    %121 = vmatprep.subr.mxu0 0.0
    %122 = vmatpush1.msra.mxu0 0.0
    %123 = vmatprep.subr.mxu0 0.0
    %124 = vmatpush1.msra.mxu0 0.0
    %125 = vmatprep.subr.mxu0 0.0
    %126 = vmatpush1.msra.mxu0 0.0
    %127 = vmatprep.subr.mxu0 0.0
    %128 = vmatpush1.msra.mxu0 0.0
    %129 = vmatprep.subr.mxu0 0.0
    %130 = vmatpush1.msra.mxu0 0.0
    %131 = vmatprep.subr.mxu0 0.0
    %132 = vmatpush1.msra.mxu0 0.0
    %133 = vmatprep.subr.mxu0 0.0
    %134 = vmatpush1.msra.mxu0 0.0
    %135 = vmatprep.subr.mxu0 0.0
    %136 = vmatpush1.msra.mxu0 0.0
    %137 = vmatprep.subr.mxu0 0.0
    %138 = vmatpush1.msra.mxu0 0.0
    %139 = vmatprep.subr.mxu0 0.0
    %140 = vmatpush1.msra.mxu0 0.0
    %141 = vmatprep.subr.mxu0 0.0
    %142 = vmatpush1.msra.mxu0 0.0
    %143 = vmatprep.subr.mxu0 0.0
    %144 = vmatpush1.msra.mxu0 0.0
    %145 = vmatprep.subr.mxu0 0.0
    %146 = vmatpush1.msra.mxu0 0.0
    %147 = vmatprep.subr.mxu0 0.0
    %148 = vmatpush1.msra.mxu0 0.0
    %149 = vmatprep.subr.mxu0 0.0
    %150 = vmatpush1.msra.mxu0 0.0
    %151 = vmatprep.mubr.f32.mxu0 0.0
    %152 = vmatmul.mubr.f32.gmra.mrb[0].mxu0 %v62
    %v153 = vpop.f32.mrb[0].mxu0
    %v154 = vadd.f32 %v85, %v153
    %v155 = vpop.f32.mrb[0].mxu0
    %156 = vmatprep.mubr.f32.mxu0 0.0
    %157 = vmatmul.mubr.f32.gmra.mrb[0].mxu0 %v63
    %v158 = vpop.f32.mrb[0].mxu0
    %v159 = vadd.f32 %v85, %v158
    %v160 = vpop.f32.mrb[0].mxu0
    %161 = vdwg.mxu0
    %v162 = vmax.f32 %v154, 0.0
    %v163 = vmax.f32 %v159, 0.0
    %v164 = vld [vmem:[#allocation7] sm:$0xff]
    %v165 = vld [vmem:[#allocation7 + $0x8] sm:$0xff]
    %v166 = vld [vmem:[#allocation7 + $0x10] sm:$0xff]
    %v167 = vld [vmem:[#allocation7 + $0x18] sm:$0xff]
    %v168 = vld [vmem:[#allocation7 + $0x20] sm:$0xff]
    %v169 = vld [vmem:[#allocation7 + $0x28] sm:$0xff]
    %v170 = vld [vmem:[#allocation7 + $0x30] sm:$0xff]
    %v171 = vld [vmem:[#allocation7 + $0x38] sm:$0xff]
    %v172 = vld [vmem:[#allocation7 + $0x40] sm:$0xff]
    %v173 = vld [vmem:[#allocation7 + $0x48] sm:$0xff]
    %v174 = vld [vmem:[#allocation7 + $0x50] sm:$0xff]
    %v175 = vld [vmem:[#allocation7 + $0x58] sm:$0xff]
    %v176 = vld [vmem:[#allocation7 + $0x60] sm:$0xff]
    %v177 = vld [vmem:[#allocation7 + $0x68] sm:$0xff]
    %v178 = vld [vmem:[#allocation7 + $0x70] sm:$0xff]
    %v179 = vld [vmem:[#allocation7 + $0x78] sm:$0xff]
    %v180 = vld [vmem:[%s4] sm:$0x1]
    %v182 = vlaneseq
    %v183 = vshrl.u32 %v182, 7
    %v184 = vsub.s32 0, %v183
    %v185 = vrot.slane %v180, %v184
    %187 = vmatprep.subr.mxu0 0.0
    %188 = vmatpush1.msra.mxu0 %v164
    %189 = vmatprep.subr.mxu0 0.0
    %190 = vmatpush1.msra.mxu0 %v165
    %191 = vmatprep.subr.mxu0 0.0
    %192 = vmatpush1.msra.mxu0 %v166
    %193 = vmatprep.subr.mxu0 0.0
    %194 = vmatpush1.msra.mxu0 %v167
    %195 = vmatprep.subr.mxu0 0.0
    %196 = vmatpush1.msra.mxu0 %v168
    %197 = vmatprep.subr.mxu0 0.0
    %198 = vmatpush1.msra.mxu0 %v169
    %199 = vmatprep.subr.mxu0 0.0
    %200 = vmatpush1.msra.mxu0 %v170
    %201 = vmatprep.subr.mxu0 0.0
    %202 = vmatpush1.msra.mxu0 %v171
    %203 = vmatprep.subr.mxu0 0.0
    %204 = vmatpush1.msra.mxu0 %v172
    %205 = vmatprep.subr.mxu0 0.0
    %206 = vmatpush1.msra.mxu0 %v173
    %207 = vmatprep.subr.mxu0 0.0
    %208 = vmatpush1.msra.mxu0 %v174
    %209 = vmatprep.subr.mxu0 0.0
    %210 = vmatpush1.msra.mxu0 %v175
    %211 = vmatprep.subr.mxu0 0.0
    %212 = vmatpush1.msra.mxu0 %v176
    %213 = vmatprep.subr.mxu0 0.0
    %214 = vmatpush1.msra.mxu0 %v177
    %215 = vmatprep.subr.mxu0 0.0
    %216 = vmatpush1.msra.mxu0 %v178
    %217 = vmatprep.subr.mxu0 0.0
    %218 = vmatpush1.msra.mxu0 %v179
    %219 = vmatprep.subr.mxu0 0.0
    %220 = vmatpush1.msra.mxu0 0.0
    %221 = vmatprep.subr.mxu0 0.0
    %222 = vmatpush1.msra.mxu0 0.0
    %223 = vmatprep.subr.mxu0 0.0
    %224 = vmatpush1.msra.mxu0 0.0
    %225 = vmatprep.subr.mxu0 0.0
    %226 = vmatpush1.msra.mxu0 0.0
    %227 = vmatprep.subr.mxu0 0.0
    %228 = vmatpush1.msra.mxu0 0.0
    %229 = vmatprep.subr.mxu0 0.0
    %230 = vmatpush1.msra.mxu0 0.0
    %231 = vmatprep.subr.mxu0 0.0
    %232 = vmatpush1.msra.mxu0 0.0
    %233 = vmatprep.subr.mxu0 0.0
    %234 = vmatpush1.msra.mxu0 0.0
    %235 = vmatprep.subr.mxu0 0.0
    %236 = vmatpush1.msra.mxu0 0.0
    %237 = vmatprep.subr.mxu0 0.0
    %238 = vmatpush1.msra.mxu0 0.0
    %239 = vmatprep.subr.mxu0 0.0
    %240 = vmatpush1.msra.mxu0 0.0
    %241 = vmatprep.subr.mxu0 0.0
    %242 = vmatpush1.msra.mxu0 0.0
    %243 = vmatprep.subr.mxu0 0.0
    %244 = vmatpush1.msra.mxu0 0.0
    %245 = vmatprep.subr.mxu0 0.0
    %246 = vmatpush1.msra.mxu0 0.0
    %247 = vmatprep.subr.mxu0 0.0
    %248 = vmatpush1.msra.mxu0 0.0
    %249 = vmatprep.subr.mxu0 0.0
    %250 = vmatpush1.msra.mxu0 0.0
    %251 = vmatprep.mubr.f32.mxu0 0.0
    %252 = vmatmul.mubr.f32.gmra.mrb[0].mxu0 %v162
    %v253 = vpop.f32.mrb[0].mxu0
    %v254 = vadd.f32 %v185, %v253
    %v255 = vpop.f32.mrb[0].mxu0
    %256 = vmatprep.mubr.f32.mxu0 0.0
    %257 = vmatmul.mubr.f32.gmra.mrb[0].mxu0 %v163
    %v258 = vpop.f32.mrb[0].mxu0
    %v259 = vadd.f32 %v185, %v258
    %v260 = vpop.f32.mrb[0].mxu0
    %261 = vdwg.mxu0
    %262 = vst [vmem:[#allocation8] sm:$0xff] %v254
    %263 = vst [vmem:[#allocation8 + $0x8] sm:$0xff] %v259
    // Predicated region
    $region34: #{_apply_pipeline.1} parent=1 // pred_check
      _
    $region35: #{_apply_pipeline.1} parent=1 // pred_check_branch
      %265 = sbr.rel (0) target = $region37
    $region36: #{_apply_pipeline.1} parent=1 // pred_region
      %s267 = ssub.s32 256, 256
      %268 = vsyncadd [#allocation4], %s267
      %s269 = sshll.u32 [#allocation8], 4
      %s270 = int_to_ptr.vmem [resolvable:$true] %s269
      %275 = dma.vmem_to_hbm [thread:$0]  %s270, 256, %s5, [#allocation4], 128, 128, 8
    $region37: #{_apply_pipeline.1} parent=1 // pred_fallthru
      _
    // Predicated region
    $region38: #{_apply_pipeline.1} parent=1 // pred_check
      _
    $region39: #{_apply_pipeline.1} parent=1 // pred_check_branch
      %277 = sbr.rel (0) target = $region41
    $region40: #{_apply_pipeline.1} parent=1 // pred_region
      %278 = dma.done [#allocation4], 256
    $region41: #{_apply_pipeline.1} parent=1 // pred_fallthru
      _
    %279 = vsyncpa [#allocation3], 1
    %280 = vsyncpa [#allocation6], 1
    %281 = vsyncpa [#allocation4], 1

</llo_original>
